<compile_context>
chip_gen: v6e
topology: v6e:2x2x1
jax: 0.10.0
libtpu: 0.0.40
codegen_flags: <defaults>
</compile_context>

<pallas_src>
import jax
import jax.numpy as jnp
from jax.experimental import pallas as pl
from jax.experimental.pallas import tpu as pltpu


_GELU_C = 0.7978845608028654   # sqrt(2/pi)
_GELU_A = 0.044715


def _round_up(n, m):
    return ((n + m - 1) // m) * m


def _gelu_tanh_f32(h):
    # tanh-approx GELU (matches jax.nn.gelu(approximate=True) / torch GELU('tanh')).
    # ~6 VALU ops + 1 EUP op per element; tanh goes to the EUP slot.
    return 0.5 * h * (1.0 + jnp.tanh(_GELU_C * (h + _GELU_A * h * h * h)))


def residual_ff_kernel(x_ref, w1_ref, b1_ref, w2_ref, b2_ref, o_ref):
    # fn(x) = GELU(x @ W1 + b1) @ W2 + b2 ; out = fn(x) + x
    x = x_ref[...]                                  # original dtype (f32) for residual
    xl = x.astype(w1_ref.dtype)                     # bf16 LHS for the MXU only
    h = jnp.dot(xl, w1_ref[...], preferred_element_type=jnp.float32)
    h = h + b1_ref[...].astype(jnp.float32)
    h = _gelu_tanh_f32(h)                           # f32 elementwise
    y = jnp.dot(h.astype(w2_ref.dtype), w2_ref[...],
                preferred_element_type=jnp.float32)
    y = y + b2_ref[...].astype(jnp.float32)
    o_ref[...] = (y + x.astype(jnp.float32)).astype(o_ref.dtype)


def residual_forward(x, w1, b1, w2, b2, *, tm=512, compute_dtype=jnp.bfloat16):
    """x: (batch, seq, dim) -> (batch, seq, dim).  y = FeedForward(x) + x.

    compute_dtype: MXU operand dtype (default bf16 -- native on v5e/v6e/v7x).
    Accumulation, bias, GELU and the residual add stay in f32; the residual
    uses the un-cast x.
    """
    B, S, D = x.shape
    H = w1.shape[1]
    T = B * S
    out_dtype = x.dtype
    cdt = jnp.dtype(compute_dtype)
    x_itemsize = jnp.dtype(x.dtype).itemsize
    out_itemsize = jnp.dtype(out_dtype).itemsize

    # Lane-dense layout: pad feature dims to multiples of 128.  Zero padding is
    # exact (padded K-columns contribute 0; padded output columns are sliced
    # off).  The activation pad / slice is only emitted when actually needed.
    Dp = _round_up(D, 128)
    Hp = _round_up(H, 128)
    pad_d = Dp - D
    pad_h = Hp - H

    x2d = x.reshape(T, D)
    if pad_d:
        x2d = jnp.pad(x2d, ((0, 0), (0, pad_d)))

    # Weights/biases: small, one-time pad + cast in the wrapper.
    w1p = (jnp.pad(w1, ((0, pad_d), (0, pad_h))) if (pad_d or pad_h) else w1).astype(cdt)
    b1p = (jnp.pad(b1, ((0, 0), (0, pad_h))) if pad_h else b1).astype(cdt)
    w2p = (jnp.pad(w2, ((0, pad_h), (0, pad_d))) if (pad_d or pad_h) else w2).astype(cdt)
    b2p = (jnp.pad(b2, ((0, 0), (0, pad_d))) if pad_d else b2).astype(cdt)

    # Token tile: big enough to fill the MXU / amortize weight pushes and the
    # ~0.35us/step pipeline overhead, clamped (to a multiple of 8 sublanes)
    # for small problems.
    tm = max(8, _round_up(tm, 8))
    tm = min(tm, _round_up(T, 8))
    grid = (pl.cdiv(T, tm),)

    # VMEM budget (double-buffered x/out tiles, resident weights x2 buffers,
    # f32 hidden intermediate).  Only request a higher scoped limit when the
    # default (~32 MiB) would be exceeded, so v7x (64 MiB physical) stays safe.
    vmem_bytes = (
        2 * tm * Dp * x_itemsize
        + 2 * tm * Dp * out_itemsize
        + 2 * (Dp * Hp + Hp + Hp * Dp + Dp) * cdt.itemsize
        + tm * Hp * 4
    )
    vmem_limit = None
    if vmem_bytes > 24 * 1024 * 1024:
        vmem_limit = min(int(vmem_bytes * 3 // 2), 96 * 1024 * 1024)
    # Weights have constant index maps so they are only DMA'd once; if tm or
    # hidden is scaled far up on v7x, single-buffering them (pl.Buffered(1))
    # would free additional headroom.

    cost = pl.CostEstimate(
        flops=4 * T * Dp * Hp,                       # two matmuls
        transcendentals=T * Hp,                      # tanh in GELU
        bytes_accessed=(T * Dp * x_itemsize
                        + (Dp * Hp + Hp + Hp * Dp + Dp) * cdt.itemsize
                        + T * Dp * out_itemsize),
    )

    out2d = pl.pallas_call(
        residual_ff_kernel,
        out_shape=jax.ShapeDtypeStruct((T, Dp), out_dtype),
        grid_spec=pltpu.PrefetchScalarGridSpec(
            num_scalar_prefetch=0,
            grid=grid,
            in_specs=[
                pl.BlockSpec((tm, Dp), lambda i: (i, 0)),   # x tile (pipelined)
                pl.BlockSpec((Dp, Hp), lambda i: (0, 0)),   # W1 (VMEM-resident)
                pl.BlockSpec((1, Hp), lambda i: (0, 0)),    # b1
                pl.BlockSpec((Hp, Dp), lambda i: (0, 0)),   # W2
                pl.BlockSpec((1, Dp), lambda i: (0, 0)),    # b2
            ],
            out_specs=pl.BlockSpec((tm, Dp), lambda i: (i, 0)),
        ),
        compiler_params=pltpu.CompilerParams(
            dimension_semantics=("parallel",),              # independent token rows
            vmem_limit_bytes=vmem_limit),
        cost_estimate=cost,
    )(x2d, w1p, b1p, w2p, b2p)

    if pad_d:
        out2d = out2d[:, :D]
    return out2d.reshape(B, S, D)


def _reference(x, w1, b1, w2, b2):
    # tanh-approx GELU, matching the kernel.
    h = jax.nn.gelu(jnp.dot(x, w1, preferred_element_type=jnp.float32) + b1[0],
                    approximate=True)
    y = jnp.dot(h, w2, preferred_element_type=jnp.float32) + b2[0]
    return y + x


if __name__ == "__main__":
    batch, seq, dim, hidden = 2, 8, 32, 64

    key = jax.random.PRNGKey(0)
    kx, kw1, kb1, kw2, kb2 = jax.random.split(key, 5)

    x = jax.random.normal(kx, (batch, seq, dim), dtype=jnp.float32)
    # Deterministic synthetic parameters for fn (FeedForward).
    w1 = jax.random.normal(kw1, (dim, hidden), dtype=jnp.float32) * 0.02
    b1 = jax.random.normal(kb1, (1, hidden), dtype=jnp.float32) * 0.02
    w2 = jax.random.normal(kw2, (hidden, dim), dtype=jnp.float32) * 0.02
    b2 = jax.random.normal(kb2, (1, dim), dtype=jnp.float32) * 0.02

    ref = _reference(x, w1, b1, w2, b2)

    # Default path: bf16 MXU operands, f32 accumulate / GELU / residual.
    out = jax.block_until_ready(residual_forward(x, w1, b1, w2, b2))
    assert out.shape == x.shape
    assert jnp.allclose(out, ref, atol=2e-2, rtol=2e-2), "bf16 mismatch vs reference"

    # Full-f32 operand path (opt-in).
    out_f32 = jax.block_until_ready(
        residual_forward(x, w1, b1, w2, b2, compute_dtype=jnp.float32))
    assert out_f32.shape == x.shape
    assert jnp.allclose(out_f32, ref, atol=3e-5, rtol=3e-5), "f32 mismatch vs reference"

    print("KERNEL_OK")
</pallas_src>

<mosaic_0001>
module attributes {stable_mosaic.version = 11 : i64} {
  func.func @residual_ff_kernel(%arg0: i32, %arg1: memref<16x128xf32, #tpu.memory_space<vmem>>, %arg2: memref<128x128xbf16, #tpu.memory_space<vmem>>, %arg3: memref<1x128xbf16, #tpu.memory_space<vmem>>, %arg4: memref<128x128xbf16, #tpu.memory_space<vmem>>, %arg5: memref<1x128xbf16, #tpu.memory_space<vmem>>, %arg6: memref<16x128xf32, #tpu.memory_space<vmem>>) attributes {dimension_semantics = [#tpu.dimension_semantics<parallel>], iteration_bounds = array<i64: 1>, scalar_prefetch = 0 : i64, scratch_operands = 0 : i64, tpu.core_type = #tpu.core_type<tc>, window_params = [{transform_indices = @transform_0, window_bounds = array<i64: 16, 128>}, {pipeline_mode = #tpu.pipeline_mode<synchronous>, transform_indices = @transform_1, window_bounds = array<i64: 128, 128>}, {pipeline_mode = #tpu.pipeline_mode<synchronous>, transform_indices = @transform_2, window_bounds = array<i64: 1, 128>}, {pipeline_mode = #tpu.pipeline_mode<synchronous>, transform_indices = @transform_3, window_bounds = array<i64: 128, 128>}, {pipeline_mode = #tpu.pipeline_mode<synchronous>, transform_indices = @transform_4, window_bounds = array<i64: 1, 128>}, {transform_indices = @transform_5, window_bounds = array<i64: 16, 128>}]} {
    %c0 = arith.constant 0 : index
    %c0_0 = arith.constant 0 : index
    %0 = vector.load %arg1[%c0, %c0_0] : memref<16x128xf32, #tpu.memory_space<vmem>>, vector<16x128xf32>
    %1 = arith.truncf %0 : vector<16x128xf32> to vector<16x128xbf16>
    %c0_1 = arith.constant 0 : index
    %c0_2 = arith.constant 0 : index
    %2 = vector.load %arg2[%c0_1, %c0_2] : memref<128x128xbf16, #tpu.memory_space<vmem>>, vector<128x128xbf16>
    %cst = arith.constant dense<0.000000e+00> : vector<16x128xf32>
    %3 = tpu.matmul %1, %2, %cst {dimension_numbers = #tpu.dot_dimension_numbers<[1], [0], [0], [1], [0, 0, 1, 1], [], []>} : vector<16x128xbf16>, vector<128x128xbf16>, vector<16x128xf32> -> vector<16x128xf32>
    %c0_3 = arith.constant 0 : index
    %c0_4 = arith.constant 0 : index
    %4 = vector.load %arg3[%c0_3, %c0_4] : memref<1x128xbf16, #tpu.memory_space<vmem>>, vector<1x128xbf16>
    %5 = arith.extf %4 : vector<1x128xbf16> to vector<1x128xf32>
    %6 = vector.broadcast %5 : vector<1x128xf32> to vector<16x128xf32>
    %7 = arith.addf %3, %6 : vector<16x128xf32>
    %cst_5 = arith.constant 5.000000e-01 : f32
    %8 = vector.broadcast %cst_5 : f32 to vector<16x128xf32>
    %9 = arith.mulf %8, %7 : vector<16x128xf32>
    %cst_6 = arith.constant 4.471500e-02 : f32
    %10 = vector.broadcast %cst_6 : f32 to vector<16x128xf32>
    %11 = arith.mulf %10, %7 : vector<16x128xf32>
    %12 = arith.mulf %11, %7 : vector<16x128xf32>
    %13 = arith.mulf %12, %7 : vector<16x128xf32>
    %14 = arith.addf %7, %13 : vector<16x128xf32>
    %cst_7 = arith.constant 0.797884583 : f32
    %15 = vector.broadcast %cst_7 : f32 to vector<16x128xf32>
    %16 = arith.mulf %15, %14 : vector<16x128xf32>
    %17 = math.tanh %16 : vector<16x128xf32>
    %cst_8 = arith.constant 1.000000e+00 : f32
    %18 = vector.broadcast %cst_8 : f32 to vector<16x128xf32>
    %19 = arith.addf %18, %17 : vector<16x128xf32>
    %20 = arith.mulf %9, %19 : vector<16x128xf32>
    %21 = arith.truncf %20 : vector<16x128xf32> to vector<16x128xbf16>
    %c0_9 = arith.constant 0 : index
    %c0_10 = arith.constant 0 : index
    %22 = vector.load %arg4[%c0_9, %c0_10] : memref<128x128xbf16, #tpu.memory_space<vmem>>, vector<128x128xbf16>
    %cst_11 = arith.constant dense<0.000000e+00> : vector<16x128xf32>
    %23 = tpu.matmul %21, %22, %cst_11 {dimension_numbers = #tpu.dot_dimension_numbers<[1], [0], [0], [1], [0, 0, 1, 1], [], []>} : vector<16x128xbf16>, vector<128x128xbf16>, vector<16x128xf32> -> vector<16x128xf32>
    %c0_12 = arith.constant 0 : index
    %c0_13 = arith.constant 0 : index
    %24 = vector.load %arg5[%c0_12, %c0_13] : memref<1x128xbf16, #tpu.memory_space<vmem>>, vector<1x128xbf16>
    %25 = arith.extf %24 : vector<1x128xbf16> to vector<1x128xf32>
    %26 = vector.broadcast %25 : vector<1x128xf32> to vector<16x128xf32>
    %27 = arith.addf %23, %26 : vector<16x128xf32>
    %28 = arith.addf %27, %0 : vector<16x128xf32>
    %c0_14 = arith.constant 0 : index
    %c0_15 = arith.constant 0 : index
    %29 = vector.load %arg6[%c0_14, %c0_15] : memref<16x128xf32, #tpu.memory_space<vmem>>, vector<16x128xf32>
    tpu.vector_store %arg6[%c0_14, %c0_15], %28 {strides = array<i32>} : memref<16x128xf32, #tpu.memory_space<vmem>>, vector<16x128xf32>,
    return
  }
  func.func @transform_0(%arg0: i32) -> (i32, i32) {
    %c0_i32 = arith.constant 0 : i32
    %c0_i32_0 = arith.constant 0 : i32
    return %arg0, %c0_i32 : i32, i32
  }
  func.func @transform_1(%arg0: i32) -> (i32, i32) {
    %c0_i32 = arith.constant 0 : i32
    %c0_i32_0 = arith.constant 0 : i32
    %c0_i32_1 = arith.constant 0 : i32
    return %c0_i32, %c0_i32_0 : i32, i32
  }
  func.func @transform_2(%arg0: i32) -> (i32, i32) {
    %c0_i32 = arith.constant 0 : i32
    %c0_i32_0 = arith.constant 0 : i32
    %c0_i32_1 = arith.constant 0 : i32
    return %c0_i32, %c0_i32_0 : i32, i32
  }
  func.func @transform_3(%arg0: i32) -> (i32, i32) {
    %c0_i32 = arith.constant 0 : i32
    %c0_i32_0 = arith.constant 0 : i32
    %c0_i32_1 = arith.constant 0 : i32
    return %c0_i32, %c0_i32_0 : i32, i32
  }
  func.func @transform_4(%arg0: i32) -> (i32, i32) {
    %c0_i32 = arith.constant 0 : i32
    %c0_i32_0 = arith.constant 0 : i32
    %c0_i32_1 = arith.constant 0 : i32
    return %c0_i32, %c0_i32_0 : i32, i32
  }
  func.func @transform_5(%arg0: i32) -> (i32, i32) {
    %c0_i32 = arith.constant 0 : i32
    %c0_i32_0 = arith.constant 0 : i32
    return %arg0, %c0_i32 : i32, i32
  }
}

</mosaic_0001>

<llo_original>
// kernel: tpu_custom_call.1
$region0: #{tpu_custom_call.1}
  #allocation0 [shape = 'u32[]', space=smem, size = 0x4, offset = 0x4, fixed_abs, tag = 'smem constant byte address 0x4 - core index']
  #allocation1 [shape = 'u32[144,128]{1,0:T(1,128)}', space=vmem, size = 0x12000, scoped, tag = 'internal scratch']
  %s0 = inlined_call_operand.hbm [shape: f32[16,128], index: 0, kind: input, shape index: {}]
  %s1 = inlined_call_operand.hbm [shape: bf16[128,128], index: 1, kind: input, shape index: {}]
  %s2 = inlined_call_operand.vmem [shape: bf16[1,128], index: 2, kind: input, shape index: {}]
  %s3 = inlined_call_operand.hbm [shape: bf16[128,128], index: 3, kind: input, shape index: {}]
  %s4 = inlined_call_operand.vmem [shape: bf16[1,128], index: 4, kind: input, shape index: {}]
  %s5 = inlined_call_operand.hbm [shape: f32[16,128], index: 5, kind: output, shape index: {}]
  %s6 = sld [smem:[#allocation0]]
  $region42: #{tpu_custom_call.1} parent=0
    _
  %s8 = ssub.s32 1, %s6
  %s9 = scalar_select 0, %s8, %s6
  $region1: #{tpu_custom_call.1} parent=0
    #allocation2 [shape = 'u8[8192]{0}', space=vmem, size = 0x2000, scoped, tag = 'input window, operand 0, single buffered']
    #allocation3 [shape = 's32[1]{0}', space=sflag, size = 0x4, scoped, tag = 'scoped memory for tpu_custom_call.1']
    #allocation4 [shape = 's32[1]{0}', space=sflag, size = 0x4, scoped, tag = 'scoped memory for tpu_custom_call.1']
    #allocation5 [shape = 'u8[32768]{0}', space=vmem, size = 0x8000, scoped, tag = 'input window, operand 1, single buffered']
    #allocation6 [shape = 's32[1]{0}', space=sflag, size = 0x4, scoped, tag = 'scoped memory for tpu_custom_call.1']
    #allocation7 [shape = 'u8[32768]{0}', space=vmem, size = 0x8000, scoped, tag = 'input window, operand 3, single buffered']
    #allocation8 [shape = 'u8[8192]{0}', space=vmem, size = 0x2000, scoped, tag = 'output window, operand 0, single buffered']
    %10 = vsyncpa [#allocation3], 0
    %11 = vsyncpa [#allocation6], 0
    %12 = vsyncpa [#allocation4], 0
    // Predicated region
    $region2: #{tpu_custom_call.1} parent=1 // pred_check
      _
    $region3: #{tpu_custom_call.1} parent=1 // pred_check_branch
      %14 = sbr.rel (0) target = $region5
    $region4: #{tpu_custom_call.1} parent=1 // pred_region
      %s16 = ssub.s32 256, 256
      %17 = vsyncadd [#allocation3], %s16
      %s18 = sshll.u32 [#allocation2], 4
      %s19 = int_to_ptr.vmem [resolvable:$true] %s18
      %24 = dma.hbm_to_vmem [thread:$0]  %s0, 256, %s19, [#allocation3], 128, 128, 8
    $region5: #{tpu_custom_call.1} parent=1 // pred_fallthru
      _
    // Predicated region
    $region6: #{tpu_custom_call.1} parent=1 // pred_check
      _
    $region7: #{tpu_custom_call.1} parent=1 // pred_check_branch
      %26 = sbr.rel (0) target = $region9
    $region8: #{tpu_custom_call.1} parent=1 // pred_region
      %s28 = ssub.s32 1024, 1024
      %29 = vsyncadd [#allocation6], %s28
      %s30 = sshll.u32 [#allocation5], 4
      %s31 = int_to_ptr.vmem [resolvable:$true] %s30
      %36 = dma.hbm_to_vmem [thread:$0]  %s1, 1024, %s31, [#allocation6], 64, 64, 4
    $region9: #{tpu_custom_call.1} parent=1 // pred_fallthru
      _
    // Predicated region
    $region10: #{tpu_custom_call.1} parent=1 // pred_check
      _
    $region11: #{tpu_custom_call.1} parent=1 // pred_check_branch
      %38 = sbr.rel (0) target = $region13
    $region12: #{tpu_custom_call.1} parent=1 // pred_region
      _
    $region13: #{tpu_custom_call.1} parent=1 // pred_fallthru
      _
    // Predicated region
    $region14: #{tpu_custom_call.1} parent=1 // pred_check
      _
    $region15: #{tpu_custom_call.1} parent=1 // pred_check_branch
      %40 = sbr.rel (0) target = $region17
    $region16: #{tpu_custom_call.1} parent=1 // pred_region
      %s42 = ssub.s32 1024, 1024
      %43 = vsyncadd [#allocation6], %s42
      %s44 = sshll.u32 [#allocation7], 4
      %s45 = int_to_ptr.vmem [resolvable:$true] %s44
      %50 = dma.hbm_to_vmem [thread:$0]  %s3, 1024, %s45, [#allocation6], 64, 64, 4
    $region17: #{tpu_custom_call.1} parent=1 // pred_fallthru
      _
    // Predicated region
    $region18: #{tpu_custom_call.1} parent=1 // pred_check
      _
    $region19: #{tpu_custom_call.1} parent=1 // pred_check_branch
      %52 = sbr.rel (0) target = $region21
    $region20: #{tpu_custom_call.1} parent=1 // pred_region
      _
    $region21: #{tpu_custom_call.1} parent=1 // pred_fallthru
      _
    // Predicated region
    $region22: #{tpu_custom_call.1} parent=1 // pred_check
      _
    $region23: #{tpu_custom_call.1} parent=1 // pred_check_branch
      %54 = sbr.rel (0) target = $region25
    $region24: #{tpu_custom_call.1} parent=1 // pred_region
      %55 = dma.done [#allocation3], 256
    $region25: #{tpu_custom_call.1} parent=1 // pred_fallthru
      _
    // Predicated region
    $region26: #{tpu_custom_call.1} parent=1 // pred_check
      _
    $region27: #{tpu_custom_call.1} parent=1 // pred_check_branch
      %57 = sbr.rel (0) target = $region29
    $region28: #{tpu_custom_call.1} parent=1 // pred_region
      %58 = dma.done [#allocation6], 1024
    $region29: #{tpu_custom_call.1} parent=1 // pred_fallthru
      _
    // Predicated region
    $region30: #{tpu_custom_call.1} parent=1 // pred_check
      _
    $region31: #{tpu_custom_call.1} parent=1 // pred_check_branch
      %60 = sbr.rel (0) target = $region33
    $region32: #{tpu_custom_call.1} parent=1 // pred_region
      %61 = dma.done [#allocation6], 1024
    $region33: #{tpu_custom_call.1} parent=1 // pred_fallthru
      _
    %v63 = vld [vmem:[#allocation2] sm:$0xff]
    %v64 = vld [vmem:[#allocation2 + $0x8] sm:$0xff]
    %v65 = vpack.c.bf16 %v64, %v63
    %v66 = vld [vmem:[#allocation5] sm:$0xf]
    %v67 = vld [vmem:[#allocation5 + $0x4] sm:$0xf]
    %v68 = vld [vmem:[#allocation5 + $0x8] sm:$0xf]
    %v69 = vld [vmem:[#allocation5 + $0xc] sm:$0xf]
    %v70 = vld [vmem:[#allocation5 + $0x10] sm:$0xf]
    %v71 = vld [vmem:[#allocation5 + $0x14] sm:$0xf]
    %v72 = vld [vmem:[#allocation5 + $0x18] sm:$0xf]
    %v73 = vld [vmem:[#allocation5 + $0x1c] sm:$0xf]
    %v74 = vld [vmem:[#allocation5 + $0x20] sm:$0xf]
    %v75 = vld [vmem:[#allocation5 + $0x24] sm:$0xf]
    %v76 = vld [vmem:[#allocation5 + $0x28] sm:$0xf]
    %v77 = vld [vmem:[#allocation5 + $0x2c] sm:$0xf]
    %v78 = vld [vmem:[#allocation5 + $0x30] sm:$0xf]
    %v79 = vld [vmem:[#allocation5 + $0x34] sm:$0xf]
    %v80 = vld [vmem:[#allocation5 + $0x38] sm:$0xf]
    %v81 = vld [vmem:[#allocation5 + $0x3c] sm:$0xf]
    %v82 = vld [vmem:[%s2] sm:$0x1]
    %v83 = vunpack.c.l.bf16 %v82
    %v84 = vlaneseq
    %v85 = vshrl.u32 %v84, 7
    %v86 = vsub.s32 0, %v85
    %v87 = vrot.slane %v83, %v86
    %v104 = vunpack.c.l.b16 %v66
    %v105 = vunpack.c.l.b16 %v67
    %v106 = vunpack.c.l.b16 %v68
    %v107 = vunpack.c.l.b16 %v69
    %v108 = vunpack.c.l.b16 %v70
    %v109 = vunpack.c.l.b16 %v71
    %v110 = vunpack.c.l.b16 %v72
    %v111 = vunpack.c.l.b16 %v73
    %v112 = vunpack.c.l.b16 %v74
    %v113 = vunpack.c.l.b16 %v75
    %v114 = vunpack.c.l.b16 %v76
    %v115 = vunpack.c.l.b16 %v77
    %v116 = vunpack.c.l.b16 %v78
    %v117 = vunpack.c.l.b16 %v79
    %v118 = vunpack.c.l.b16 %v80
    %v119 = vunpack.c.l.b16 %v81
    %v120 = vpack.c.b16 %v105, %v104
    %v121 = vpack.c.b16 %v107, %v106
    %v122 = vpack.c.b16 %v109, %v108
    %v123 = vpack.c.b16 %v111, %v110
    %v124 = vpack.c.b16 %v113, %v112
    %v125 = vpack.c.b16 %v115, %v114
    %v126 = vpack.c.b16 %v117, %v116
    %v127 = vpack.c.b16 %v119, %v118
    %136 = vmatprep.subr.bf16.mxu0 0
    %137 = vmatpush1.bf16.msra.mxu0 %v127
    %138 = vmatprep.subr.bf16.mxu0 0
    %139 = vmatpush1.bf16.msra.mxu0 %v126
    %140 = vmatprep.subr.bf16.mxu0 0
    %141 = vmatpush1.bf16.msra.mxu0 %v125
    %142 = vmatprep.subr.bf16.mxu0 0
    %143 = vmatpush1.bf16.msra.mxu0 %v124
    %144 = vmatprep.subr.bf16.mxu0 0
    %145 = vmatpush1.bf16.msra.mxu0 %v123
    %146 = vmatprep.subr.bf16.mxu0 0
    %147 = vmatpush1.bf16.msra.mxu0 %v122
    %148 = vmatprep.subr.bf16.mxu0 0
    %149 = vmatpush1.bf16.msra.mxu0 %v121
    %150 = vmatprep.subr.bf16.mxu0 0
    %151 = vmatpush1.bf16.msra.mxu0 %v120
    %152 = vmatprep.subr.bf16.mxu0 0
    %153 = vmatpush2.bf16.msra.mxu0 0
    %154 = vmatprep.subr.bf16.mxu0 0
    %155 = vmatpush2.bf16.msra.mxu0 0
    %156 = vmatprep.subr.bf16.mxu0 0
    %157 = vmatpush2.bf16.msra.mxu0 0
    %158 = vmatprep.subr.bf16.mxu0 0
    %159 = vmatpush2.bf16.msra.mxu0 0
    %160 = vmatprep.subr.bf16.mxu0 0
    %161 = vmatpush2.bf16.msra.mxu0 0
    %162 = vmatprep.subr.bf16.mxu0 0
    %163 = vmatpush2.bf16.msra.mxu0 0
    %164 = vmatprep.subr.bf16.mxu0 0
    %165 = vmatpush2.bf16.msra.mxu0 0
    %166 = vmatprep.subr.bf16.mxu0 0
    %167 = vmatpush2.bf16.msra.mxu0 0
    %168 = vmatprep.mubr.bf16.mxu0 0
    %169 = vmatmul.mubr.bf16.gmra.mxu0 %v65
    %v170 = vpop.f32.mrf.mxu0
    %v171 = vadd.f32 %v87, %v170
    %v172 = vpop.f32.mrf.mxu0
    %v173 = vpop.f32.mrf.mxu0
    %v174 = vadd.f32 %v87, %v173
    %v175 = vpop.f32.mrf.mxu0
    %176 = vdwg.mxu0
    %v177 = vmul.f32 %v171, 0.5
    %v178 = vmul.f32 %v174, 0.5
    %v179 = vmul.f32 %v171, 0.044715
    %v180 = vmul.f32 %v174, 0.044715
    %v181 = vmul.f32 %v179, %v171
    %v182 = vmul.f32 %v180, %v174
    %v183 = vmul.f32 %v181, %v171
    %v184 = vmul.f32 %v182, %v174
    %v185 = vadd.f32 %v171, %v183
    %v186 = vadd.f32 %v174, %v184
    %v187 = vmul.f32 %v185, 0.7978846
    %v188 = vmul.f32 %v186, 0.7978846
    %v189 = vtanh.pop %v187
    %v190 = vtanh.pop %v188
    %v191 = vadd.f32 %v189, 1.0
    %v192 = vadd.f32 %v190, 1.0
    %v193 = vmul.f32 %v177, %v191
    %v194 = vmul.f32 %v178, %v192
    %v195 = vpack.c.bf16 %v194, %v193
    %v196 = vld [vmem:[#allocation7] sm:$0xf]
    %v197 = vld [vmem:[#allocation7 + $0x4] sm:$0xf]
    %v198 = vld [vmem:[#allocation7 + $0x8] sm:$0xf]
    %v199 = vld [vmem:[#allocation7 + $0xc] sm:$0xf]
    %v200 = vld [vmem:[#allocation7 + $0x10] sm:$0xf]
    %v201 = vld [vmem:[#allocation7 + $0x14] sm:$0xf]
    %v202 = vld [vmem:[#allocation7 + $0x18] sm:$0xf]
    %v203 = vld [vmem:[#allocation7 + $0x1c] sm:$0xf]
    %v204 = vld [vmem:[#allocation7 + $0x20] sm:$0xf]
    %v205 = vld [vmem:[#allocation7 + $0x24] sm:$0xf]
    %v206 = vld [vmem:[#allocation7 + $0x28] sm:$0xf]
    %v207 = vld [vmem:[#allocation7 + $0x2c] sm:$0xf]
    %v208 = vld [vmem:[#allocation7 + $0x30] sm:$0xf]
    %v209 = vld [vmem:[#allocation7 + $0x34] sm:$0xf]
    %v210 = vld [vmem:[#allocation7 + $0x38] sm:$0xf]
    %v211 = vld [vmem:[#allocation7 + $0x3c] sm:$0xf]
    %v212 = vld [vmem:[%s4] sm:$0x1]
    %v213 = vunpack.c.l.bf16 %v212
    %v214 = vlaneseq
    %v215 = vshrl.u32 %v214, 7
    %v216 = vsub.s32 0, %v215
    %v217 = vrot.slane %v213, %v216
    %v234 = vunpack.c.l.b16 %v196
    %v235 = vunpack.c.l.b16 %v197
    %v236 = vunpack.c.l.b16 %v198
    %v237 = vunpack.c.l.b16 %v199
    %v238 = vunpack.c.l.b16 %v200
    %v239 = vunpack.c.l.b16 %v201
    %v240 = vunpack.c.l.b16 %v202
    %v241 = vunpack.c.l.b16 %v203
    %v242 = vunpack.c.l.b16 %v204
    %v243 = vunpack.c.l.b16 %v205
    %v244 = vunpack.c.l.b16 %v206
    %v245 = vunpack.c.l.b16 %v207
    %v246 = vunpack.c.l.b16 %v208
    %v247 = vunpack.c.l.b16 %v209
    %v248 = vunpack.c.l.b16 %v210
    %v249 = vunpack.c.l.b16 %v211
    %v250 = vpack.c.b16 %v235, %v234
    %v251 = vpack.c.b16 %v237, %v236
    %v252 = vpack.c.b16 %v239, %v238
    %v253 = vpack.c.b16 %v241, %v240
    %v254 = vpack.c.b16 %v243, %v242
    %v255 = vpack.c.b16 %v245, %v244
    %v256 = vpack.c.b16 %v247, %v246
    %v257 = vpack.c.b16 %v249, %v248
    %266 = vmatprep.subr.bf16.mxu0 0
    %267 = vmatpush1.bf16.msra.mxu0 %v257
    %268 = vmatprep.subr.bf16.mxu0 0
    %269 = vmatpush1.bf16.msra.mxu0 %v256
    %270 = vmatprep.subr.bf16.mxu0 0
    %271 = vmatpush1.bf16.msra.mxu0 %v255
    %272 = vmatprep.subr.bf16.mxu0 0
    %273 = vmatpush1.bf16.msra.mxu0 %v254
    %274 = vmatprep.subr.bf16.mxu0 0
    %275 = vmatpush1.bf16.msra.mxu0 %v253
    %276 = vmatprep.subr.bf16.mxu0 0
    %277 = vmatpush1.bf16.msra.mxu0 %v252
    %278 = vmatprep.subr.bf16.mxu0 0
    %279 = vmatpush1.bf16.msra.mxu0 %v251
    %280 = vmatprep.subr.bf16.mxu0 0
    %281 = vmatpush1.bf16.msra.mxu0 %v250
    %282 = vmatprep.subr.bf16.mxu0 0
    %283 = vmatpush2.bf16.msra.mxu0 0
    %284 = vmatprep.subr.bf16.mxu0 0
    %285 = vmatpush2.bf16.msra.mxu0 0
    %286 = vmatprep.subr.bf16.mxu0 0
    %287 = vmatpush2.bf16.msra.mxu0 0
    %288 = vmatprep.subr.bf16.mxu0 0
    %289 = vmatpush2.bf16.msra.mxu0 0
    %290 = vmatprep.subr.bf16.mxu0 0
    %291 = vmatpush2.bf16.msra.mxu0 0
    %292 = vmatprep.subr.bf16.mxu0 0
    %293 = vmatpush2.bf16.msra.mxu0 0
    %294 = vmatprep.subr.bf16.mxu0 0
    %295 = vmatpush2.bf16.msra.mxu0 0
    %296 = vmatprep.subr.bf16.mxu0 0
    %297 = vmatpush2.bf16.msra.mxu0 0
    %298 = vmatprep.mubr.bf16.mxu0 0
    %299 = vmatmul.mubr.bf16.gmra.mxu0 %v195
    %v300 = vpop.f32.mrf.mxu0
    %v301 = vadd.f32 %v217, %v300
    %v302 = vpop.f32.mrf.mxu0
    %v303 = vpop.f32.mrf.mxu0
    %v304 = vadd.f32 %v217, %v303
    %v305 = vpop.f32.mrf.mxu0
    %306 = vdwg.mxu0
    %v307 = vadd.f32 %v301, %v63
    %v308 = vadd.f32 %v304, %v64
    %309 = vst [vmem:[#allocation8] sm:$0xff] %v307
    %310 = vst [vmem:[#allocation8 + $0x8] sm:$0xff] %v308
    // Predicated region
    $region34: #{tpu_custom_call.1} parent=1 // pred_check
      _
    $region35: #{tpu_custom_call.1} parent=1 // pred_check_branch
      %312 = sbr.rel (0) target = $region37
    $region36: #{tpu_custom_call.1} parent=1 // pred_region
      %s314 = ssub.s32 256, 256
      %315 = vsyncadd [#allocation4], %s314
      %s316 = sshll.u32 [#allocation8], 4
      %s317 = int_to_ptr.vmem [resolvable:$true] %s316
      %322 = dma.vmem_to_hbm [thread:$0]  %s317, 256, %s5, [#allocation4], 128, 128, 8
    $region37: #{tpu_custom_call.1} parent=1 // pred_fallthru
      _
    // Predicated region
    $region38: #{tpu_custom_call.1} parent=1 // pred_check
      _
    $region39: #{tpu_custom_call.1} parent=1 // pred_check_branch
      %324 = sbr.rel (0) target = $region41
    $region40: #{tpu_custom_call.1} parent=1 // pred_region
      %325 = dma.done [#allocation4], 256
    $region41: #{tpu_custom_call.1} parent=1 // pred_fallthru
      _
    %326 = vsyncpa [#allocation3], 1
    %327 = vsyncpa [#allocation6], 1
    %328 = vsyncpa [#allocation4], 1

</llo_original>
